<compile_context>
chip_gen: v5e
topology: v5e:2x2
jax: 0.10.0
libtpu: 0.0.40
codegen_flags: <defaults>
</compile_context>

<pallas_src>
import functools

import jax
import jax.numpy as jnp
import numpy as np
from jax.experimental import pallas as pl
from jax.experimental.pallas import tpu as pltpu


# ----------------------------- small helpers ---------------------------------


def _round_up(x, m):
    return ((x + m - 1) // m) * m


def _cdiv(a, b):
    return -(-a // b)


# ----------------------------- kernel -----------------------------------------


def _mlp_kernel(x_ref, w0_ref, w_ref, b_ref, out_ref, h_ref):
    """Fused 5-layer MLP (both actor & critic branches stacked along lanes).

    x_ref  : (TB, F_pad)   compute dtype (bf16 or f32)
    w0_ref : (F_pad, D)    compute dtype  (layer 0 weight)
    w_ref  : (4, D, D)     compute dtype  (layers 1..4 weights)
    b_ref  : (5, 1, D)     f32            (all biases)
    out_ref: (TB, D)       f32            (pi latent | vf latent, lane-dense)
    h_ref  : (TB, D)       VMEM scratch, compute dtype (activation staging)
    """
    # Layer 0: fused first layers of upper+lower nets of both branches.
    acc = jnp.dot(x_ref[...], w0_ref[...], preferred_element_type=jnp.float32)
    h = jnp.maximum(acc + b_ref[0], 0.0)            # bias-add + ReLU in f32

    # Layers 1..4 — statically unrolled so MXU pushes of layer k overlap the
    # VPU bias/ReLU epilogue of layer k-1.
    for layer in range(4):
        h_ref[...] = h.astype(h_ref.dtype)          # bound live vregs via VMEM
        acc = jnp.dot(h_ref[...], w_ref[layer],
                      preferred_element_type=jnp.float32)
        h = jnp.maximum(acc + b_ref[layer + 1], 0.0)

    out_ref[...] = h.astype(out_ref.dtype)


# ----------------------------- one-time param fusion (host side) --------------


def _np_blockdiag(a, b):
    ra, ca = a.shape
    rb, cb = b.shape
    out = np.zeros((ra + rb, ca + cb), np.float32)
    out[:ra, :ca] = a
    out[ra:, ca:] = b
    return out


def _branch_fused_layers(p, feature_dim):
    """Fuse one branch's upper/lower/merged nets into 5 (W, b) numpy layers.

    Channel layout until the merge: cols 0..3 = upper net, cols 4..5 = lower
    net.  The "concat" in the PyTorch forward is exactly this 6-wide state, so
    the merged net's first layer applies verbatim.
    """
    (uw1, ub1, uw2, ub2, uw3, ub3,
     lw1, lb1, lw2, lb2, lw3, lb3,
     mw1, mb1, mw2, mb2) = [np.asarray(a, np.float32) for a in p]
    F = feature_dim

    A1 = np.zeros((F, 6), np.float32)
    A1[:F - 1, :4] = uw1                      # upper net reads x[:, :-1]
    A1[F - 1:, 4:6] = lw1                     # lower net reads x[:, -1:]
    c1 = np.concatenate([ub1, lb1], axis=1)

    A2, c2 = _np_blockdiag(uw2, lw2), np.concatenate([ub2, lb2], axis=1)
    A3, c3 = _np_blockdiag(uw3, lw3), np.concatenate([ub3, lb3], axis=1)
    A4, c4 = mw1, mb1                         # merged layer 1 (6 -> 6)
    A5, c5 = mw2, mb2                         # merged layer 2 (6 -> latent)
    return [(A1, c1), (A2, c2), (A3, c3), (A4, c4), (A5, c5)]


def build_fused_params(params_pi, params_vf, feature_dim, latent_pi, latent_vf,
                       compute_dtype=jnp.bfloat16):
    """Build the device-resident fused slabs ONCE per parameter update.

    Returns:
      w0     : (F_pad, D)  compute_dtype — layer-0 weight (x -> 12 channels)
      w_rest : (4, D, D)   compute_dtype — layers 1..4 (block-diag pi/vf)
      b_slab : (5, 1, D)   f32           — all biases
    Zero padding contributes exact zeros through every dot/bias/ReLU, so the
    fusion reproduces the PyTorch forward exactly (up to MXU rounding).
    """
    F = feature_dim
    F_pad = max(8, _round_up(F, 8))
    D = max(128, _round_up(latent_pi + latent_vf, 128))

    pi_layers = _branch_fused_layers(params_pi, F)
    vf_layers = _branch_fused_layers(params_vf, F)

    Ws, Bs = [], []
    for k, ((wp, bp), (wv, bv)) in enumerate(zip(pi_layers, vf_layers)):
        if k == 0:
            W = np.concatenate([wp, wv], axis=1)   # both branches read same x
        else:
            W = _np_blockdiag(wp, wv)
        b = np.concatenate([bp, bv], axis=1)
        rows = F_pad if k == 0 else D
        Wfull = np.zeros((rows, D), np.float32)
        Wfull[:W.shape[0], :W.shape[1]] = W
        bfull = np.zeros((1, D), np.float32)
        bfull[:, :b.shape[1]] = b
        Ws.append(Wfull)
        Bs.append(bfull)

    w0 = jnp.asarray(Ws[0], compute_dtype)                       # (F_pad, D)
    w_rest = jnp.asarray(np.stack(Ws[1:], axis=0), compute_dtype)  # (4, D, D)
    b_slab = jnp.asarray(np.stack(Bs, axis=0), jnp.float32)       # (5, 1, D)
    return w0, w_rest, b_slab


# ----------------------------- forward wrapper --------------------------------


@functools.partial(jax.jit, static_argnums=(4, 5))
def custom_mlp_forward(x, w0, w_rest, b_slab, latent_pi, latent_vf):
    """x: (B, F) f32. Returns (actor_latent (B, latent_pi), critic (B, latent_vf))."""
    B, F = x.shape
    F_pad, D = w0.shape
    assert F_pad >= F
    compute_dtype = w0.dtype

    # Batch tiling: TB <= 1024, >= 2 grid steps for B > 256 (v7x has 2 TCs),
    # padded rows kept small for awkward B.
    TB_CAP = 1024
    B8 = _round_up(B, 8)
    n_tiles = max(1, _cdiv(B8, TB_CAP))
    if n_tiles == 1 and B8 > 256:
        n_tiles = 2
    TB = _round_up(_cdiv(B8, n_tiles), 8)
    B_pad = TB * n_tiles

    # Pad batch + round the tiny feature axis up to a sublane multiple only
    # (no 128-lane copy of x).
    x_pad = jnp.pad(x.astype(compute_dtype),
                    ((0, B_pad - B), (0, F_pad - F)))

    out = pl.pallas_call(
        _mlp_kernel,
        out_shape=jax.ShapeDtypeStruct((B_pad, D), jnp.float32),
        grid_spec=pltpu.PrefetchScalarGridSpec(
            num_scalar_prefetch=0,
            grid=(n_tiles,),
            in_specs=[
                pl.BlockSpec((TB, F_pad), lambda i: (i, 0)),      # x tile
                pl.BlockSpec((F_pad, D), lambda i: (0, 0)),       # layer-0 W (resident)
                pl.BlockSpec((4, D, D), lambda i: (0, 0, 0)),     # layers 1..4 W (resident)
                pl.BlockSpec((5, 1, D), lambda i: (0, 0, 0)),     # biases (resident)
            ],
            out_specs=pl.BlockSpec((TB, D), lambda i: (i, 0)),
            scratch_shapes=[pltpu.VMEM((TB, D), compute_dtype)],
        ),
        compiler_params=pltpu.CompilerParams(
            dimension_semantics=("parallel",),
            vmem_limit_bytes=32 * 1024 * 1024,
        ),
    )(x_pad, w0, w_rest, b_slab)

    actor = out[:B, :latent_pi]
    critic = out[:B, latent_pi:latent_pi + latent_vf]
    return actor, critic


# ----------------------------- param init (mirrors nn.Linear) ------------------


def _init_linear(key, fan_in, fan_out):
    """nn.Linear-style uniform(-1/sqrt(fan_in), 1/sqrt(fan_in)); weight stored
    (in, out); bias stored (1, out)."""
    kw, kb = jax.random.split(key)
    bound = 1.0 / np.sqrt(fan_in)
    w = jax.random.uniform(kw, (fan_in, fan_out), jnp.float32, -bound, bound)
    b = jax.random.uniform(kb, (1, fan_out), jnp.float32, -bound, bound)
    return w, b


def make_branch_params(key, feature_dim, last_layer_dim):
    """The 16 arrays of one branch (upper, lower, merged nets)."""
    keys = jax.random.split(key, 8)
    uw1, ub1 = _init_linear(keys[0], feature_dim - 1, 4)
    uw2, ub2 = _init_linear(keys[1], 4, 4)
    uw3, ub3 = _init_linear(keys[2], 4, 4)
    lw1, lb1 = _init_linear(keys[3], 1, 2)
    lw2, lb2 = _init_linear(keys[4], 2, 2)
    lw3, lb3 = _init_linear(keys[5], 2, 2)
    mw1, mb1 = _init_linear(keys[6], 4 + 2, 6)
    mw2, mb2 = _init_linear(keys[7], 6, last_layer_dim)
    return (uw1, ub1, uw2, ub2, uw3, ub3,
            lw1, lb1, lw2, lb2, lw3, lb3,
            mw1, mb1, mw2, mb2)


# ----------------------------- pure-JAX reference ------------------------------


def reference_branch(x, p):
    (uw1, ub1, uw2, ub2, uw3, ub3,
     lw1, lb1, lw2, lb2, lw3, lb3,
     mw1, mb1, mw2, mb2) = p
    xu = x[:, :-1]
    xl = x[:, -1:]
    h = jax.nn.relu(xu @ uw1 + ub1)
    h = jax.nn.relu(h @ uw2 + ub2)
    h = jax.nn.relu(h @ uw3 + ub3)
    g = jax.nn.relu(xl @ lw1 + lb1)
    g = jax.nn.relu(g @ lw2 + lb2)
    g = jax.nn.relu(g @ lw3 + lb3)
    m = jnp.concatenate([h, g], axis=1)
    m = jax.nn.relu(m @ mw1 + mb1)
    return jax.nn.relu(m @ mw2 + mb2)      # PyTorch merged_net ends with ReLU


# ----------------------------- main --------------------------------------------


if __name__ == "__main__":
    B = 8                 # batch
    FEATURE_DIM = 9       # upper net sees 8 features, lower net sees 1
    LATENT_PI = 64
    LATENT_VF = 64

    root = jax.random.PRNGKey(0)
    k_x, k_pi, k_vf = jax.random.split(root, 3)

    x = jax.random.normal(k_x, (B, FEATURE_DIM), jnp.float32)
    params_pi = make_branch_params(k_pi, FEATURE_DIM, LATENT_PI)
    params_vf = make_branch_params(k_vf, FEATURE_DIM, LATENT_VF)

    actor_ref = reference_branch(x, params_pi)
    critic_ref = reference_branch(x, params_vf)

    # ---- f32 operand path: proves the fusion is exact (tight tolerance) ----
    w0_f32, wr_f32, b_f32 = build_fused_params(
        params_pi, params_vf, FEATURE_DIM, LATENT_PI, LATENT_VF,
        compute_dtype=jnp.float32)
    actor32, critic32 = custom_mlp_forward(x, w0_f32, wr_f32, b_f32,
                                           LATENT_PI, LATENT_VF)
    jax.block_until_ready((actor32, critic32))
    np.testing.assert_allclose(np.asarray(actor32), np.asarray(actor_ref),
                               rtol=1e-5, atol=1e-5)
    np.testing.assert_allclose(np.asarray(critic32), np.asarray(critic_ref),
                               rtol=1e-5, atol=1e-5)

    # ---- bf16 operand path: MXU-native on v6e/v7x, half the DMA bytes ----
    # (f32 accumulate + f32 bias/ReLU; looser tolerance per the review)
    w0_bf, wr_bf, b_bf = build_fused_params(
        params_pi, params_vf, FEATURE_DIM, LATENT_PI, LATENT_VF,
        compute_dtype=jnp.bfloat16)
    actor16, critic16 = custom_mlp_forward(x, w0_bf, wr_bf, b_bf,
                                           LATENT_PI, LATENT_VF)
    jax.block_until_ready((actor16, critic16))
    np.testing.assert_allclose(np.asarray(actor16), np.asarray(actor_ref),
                               rtol=3e-2, atol=3e-2)
    np.testing.assert_allclose(np.asarray(critic16), np.asarray(critic_ref),
                               rtol=3e-2, atol=3e-2)

    print("KERNEL_OK")
</pallas_src>

<mosaic_0001>
module attributes {stable_mosaic.version = 11 : i64} {
  func.func @_mlp_kernel(%arg0: i32, %arg1: memref<8x16xf32, #tpu.memory_space<vmem>>, %arg2: memref<16x128xf32, #tpu.memory_space<vmem>>, %arg3: memref<4x128x128xf32, #tpu.memory_space<vmem>>, %arg4: memref<5x1x128xf32, #tpu.memory_space<vmem>>, %arg5: memref<8x128xf32, #tpu.memory_space<vmem>>, %arg6: memref<8x128xf32, #tpu.memory_space<vmem>>) attributes {dimension_semantics = [#tpu.dimension_semantics<parallel>], iteration_bounds = array<i64: 1>, scalar_prefetch = 0 : i64, scratch_operands = 1 : i64, tpu.core_type = #tpu.core_type<tc>, window_params = [{transform_indices = @transform_0, window_bounds = array<i64: 8, 16>}, {pipeline_mode = #tpu.pipeline_mode<synchronous>, transform_indices = @transform_1, window_bounds = array<i64: 16, 128>}, {pipeline_mode = #tpu.pipeline_mode<synchronous>, transform_indices = @transform_2, window_bounds = array<i64: 4, 128, 128>}, {pipeline_mode = #tpu.pipeline_mode<synchronous>, transform_indices = @transform_3, window_bounds = array<i64: 5, 1, 128>}, {transform_indices = @transform_4, window_bounds = array<i64: 8, 128>}]} {
    %c0 = arith.constant 0 : index
    %c0_0 = arith.constant 0 : index
    %0 = vector.load %arg1[%c0, %c0_0] : memref<8x16xf32, #tpu.memory_space<vmem>>, vector<8x16xf32>
    %c0_1 = arith.constant 0 : index
    %c0_2 = arith.constant 0 : index
    %1 = vector.load %arg2[%c0_1, %c0_2] : memref<16x128xf32, #tpu.memory_space<vmem>>, vector<16x128xf32>
    %cst = arith.constant dense<0.000000e+00> : vector<8x128xf32>
    %2 = tpu.matmul %0, %1, %cst {dimension_numbers = #tpu.dot_dimension_numbers<[1], [0], [0], [1], [0, 0, 1, 1], [], []>} : vector<8x16xf32>, vector<16x128xf32>, vector<8x128xf32> -> vector<8x128xf32>
    %c0_3 = arith.constant 0 : index
    %c0_4 = arith.constant 0 : index
    %c0_5 = arith.constant 0 : index
    %3 = vector.load %arg4[%c0_3, %c0_4, %c0_5] : memref<5x1x128xf32, #tpu.memory_space<vmem>>, vector<1x1x128xf32>
    %4 = vector.shape_cast %3 : vector<1x1x128xf32> to vector<1x128xf32>
    %5 = vector.broadcast %4 : vector<1x128xf32> to vector<8x128xf32>
    %6 = arith.addf %2, %5 : vector<8x128xf32>
    %cst_6 = arith.constant 0.000000e+00 : f32
    %7 = vector.broadcast %cst_6 : f32 to vector<8x128xf32>
    %8 = arith.maximumf %6, %7 : vector<8x128xf32>
    %c0_7 = arith.constant 0 : index
    %c0_8 = arith.constant 0 : index
    %9 = vector.load %arg6[%c0_7, %c0_8] : memref<8x128xf32, #tpu.memory_space<vmem>>, vector<8x128xf32>
    tpu.vector_store %arg6[%c0_7, %c0_8], %8 {strides = array<i32>} : memref<8x128xf32, #tpu.memory_space<vmem>>, vector<8x128xf32>,
    %c0_9 = arith.constant 0 : index
    %c0_10 = arith.constant 0 : index
    %10 = vector.load %arg6[%c0_9, %c0_10] : memref<8x128xf32, #tpu.memory_space<vmem>>, vector<8x128xf32>
    %c0_11 = arith.constant 0 : index
    %c0_12 = arith.constant 0 : index
    %c0_13 = arith.constant 0 : index
    %11 = vector.load %arg3[%c0_11, %c0_12, %c0_13] : memref<4x128x128xf32, #tpu.memory_space<vmem>>, vector<1x128x128xf32>
    %12 = vector.shape_cast %11 : vector<1x128x128xf32> to vector<128x128xf32>
    %cst_14 = arith.constant dense<0.000000e+00> : vector<8x128xf32>
    %13 = tpu.matmul %10, %12, %cst_14 {dimension_numbers = #tpu.dot_dimension_numbers<[1], [0], [0], [1], [0, 0, 1, 1], [], []>} : vector<8x128xf32>, vector<128x128xf32>, vector<8x128xf32> -> vector<8x128xf32>
    %c1 = arith.constant 1 : index
    %c0_15 = arith.constant 0 : index
    %c0_16 = arith.constant 0 : index
    %14 = vector.load %arg4[%c1, %c0_15, %c0_16] : memref<5x1x128xf32, #tpu.memory_space<vmem>>, vector<1x1x128xf32>
    %15 = vector.shape_cast %14 : vector<1x1x128xf32> to vector<1x128xf32>
    %16 = vector.broadcast %15 : vector<1x128xf32> to vector<8x128xf32>
    %17 = arith.addf %13, %16 : vector<8x128xf32>
    %cst_17 = arith.constant 0.000000e+00 : f32
    %18 = vector.broadcast %cst_17 : f32 to vector<8x128xf32>
    %19 = arith.maximumf %17, %18 : vector<8x128xf32>
    %c0_18 = arith.constant 0 : index
    %c0_19 = arith.constant 0 : index
    %20 = vector.load %arg6[%c0_18, %c0_19] : memref<8x128xf32, #tpu.memory_space<vmem>>, vector<8x128xf32>
    tpu.vector_store %arg6[%c0_18, %c0_19], %19 {strides = array<i32>} : memref<8x128xf32, #tpu.memory_space<vmem>>, vector<8x128xf32>,
    %c0_20 = arith.constant 0 : index
    %c0_21 = arith.constant 0 : index
    %21 = vector.load %arg6[%c0_20, %c0_21] : memref<8x128xf32, #tpu.memory_space<vmem>>, vector<8x128xf32>
    %c1_22 = arith.constant 1 : index
    %c0_23 = arith.constant 0 : index
    %c0_24 = arith.constant 0 : index
    %22 = vector.load %arg3[%c1_22, %c0_23, %c0_24] : memref<4x128x128xf32, #tpu.memory_space<vmem>>, vector<1x128x128xf32>
    %23 = vector.shape_cast %22 : vector<1x128x128xf32> to vector<128x128xf32>
    %cst_25 = arith.constant dense<0.000000e+00> : vector<8x128xf32>
    %24 = tpu.matmul %21, %23, %cst_25 {dimension_numbers = #tpu.dot_dimension_numbers<[1], [0], [0], [1], [0, 0, 1, 1], [], []>} : vector<8x128xf32>, vector<128x128xf32>, vector<8x128xf32> -> vector<8x128xf32>
    %c2 = arith.constant 2 : index
    %c0_26 = arith.constant 0 : index
    %c0_27 = arith.constant 0 : index
    %25 = vector.load %arg4[%c2, %c0_26, %c0_27] : memref<5x1x128xf32, #tpu.memory_space<vmem>>, vector<1x1x128xf32>
    %26 = vector.shape_cast %25 : vector<1x1x128xf32> to vector<1x128xf32>
    %27 = vector.broadcast %26 : vector<1x128xf32> to vector<8x128xf32>
    %28 = arith.addf %24, %27 : vector<8x128xf32>
    %cst_28 = arith.constant 0.000000e+00 : f32
    %29 = vector.broadcast %cst_28 : f32 to vector<8x128xf32>
    %30 = arith.maximumf %28, %29 : vector<8x128xf32>
    %c0_29 = arith.constant 0 : index
    %c0_30 = arith.constant 0 : index
    %31 = vector.load %arg6[%c0_29, %c0_30] : memref<8x128xf32, #tpu.memory_space<vmem>>, vector<8x128xf32>
    tpu.vector_store %arg6[%c0_29, %c0_30], %30 {strides = array<i32>} : memref<8x128xf32, #tpu.memory_space<vmem>>, vector<8x128xf32>,
    %c0_31 = arith.constant 0 : index
    %c0_32 = arith.constant 0 : index
    %32 = vector.load %arg6[%c0_31, %c0_32] : memref<8x128xf32, #tpu.memory_space<vmem>>, vector<8x128xf32>
    %c2_33 = arith.constant 2 : index
    %c0_34 = arith.constant 0 : index
    %c0_35 = arith.constant 0 : index
    %33 = vector.load %arg3[%c2_33, %c0_34, %c0_35] : memref<4x128x128xf32, #tpu.memory_space<vmem>>, vector<1x128x128xf32>
    %34 = vector.shape_cast %33 : vector<1x128x128xf32> to vector<128x128xf32>
    %cst_36 = arith.constant dense<0.000000e+00> : vector<8x128xf32>
    %35 = tpu.matmul %32, %34, %cst_36 {dimension_numbers = #tpu.dot_dimension_numbers<[1], [0], [0], [1], [0, 0, 1, 1], [], []>} : vector<8x128xf32>, vector<128x128xf32>, vector<8x128xf32> -> vector<8x128xf32>
    %c3 = arith.constant 3 : index
    %c0_37 = arith.constant 0 : index
    %c0_38 = arith.constant 0 : index
    %36 = vector.load %arg4[%c3, %c0_37, %c0_38] : memref<5x1x128xf32, #tpu.memory_space<vmem>>, vector<1x1x128xf32>
    %37 = vector.shape_cast %36 : vector<1x1x128xf32> to vector<1x128xf32>
    %38 = vector.broadcast %37 : vector<1x128xf32> to vector<8x128xf32>
    %39 = arith.addf %35, %38 : vector<8x128xf32>
    %cst_39 = arith.constant 0.000000e+00 : f32
    %40 = vector.broadcast %cst_39 : f32 to vector<8x128xf32>
    %41 = arith.maximumf %39, %40 : vector<8x128xf32>
    %c0_40 = arith.constant 0 : index
    %c0_41 = arith.constant 0 : index
    %42 = vector.load %arg6[%c0_40, %c0_41] : memref<8x128xf32, #tpu.memory_space<vmem>>, vector<8x128xf32>
    tpu.vector_store %arg6[%c0_40, %c0_41], %41 {strides = array<i32>} : memref<8x128xf32, #tpu.memory_space<vmem>>, vector<8x128xf32>,
    %c0_42 = arith.constant 0 : index
    %c0_43 = arith.constant 0 : index
    %43 = vector.load %arg6[%c0_42, %c0_43] : memref<8x128xf32, #tpu.memory_space<vmem>>, vector<8x128xf32>
    %c3_44 = arith.constant 3 : index
    %c0_45 = arith.constant 0 : index
    %c0_46 = arith.constant 0 : index
    %44 = vector.load %arg3[%c3_44, %c0_45, %c0_46] : memref<4x128x128xf32, #tpu.memory_space<vmem>>, vector<1x128x128xf32>
    %45 = vector.shape_cast %44 : vector<1x128x128xf32> to vector<128x128xf32>
    %cst_47 = arith.constant dense<0.000000e+00> : vector<8x128xf32>
    %46 = tpu.matmul %43, %45, %cst_47 {dimension_numbers = #tpu.dot_dimension_numbers<[1], [0], [0], [1], [0, 0, 1, 1], [], []>} : vector<8x128xf32>, vector<128x128xf32>, vector<8x128xf32> -> vector<8x128xf32>
    %c4 = arith.constant 4 : index
    %c0_48 = arith.constant 0 : index
    %c0_49 = arith.constant 0 : index
    %47 = vector.load %arg4[%c4, %c0_48, %c0_49] : memref<5x1x128xf32, #tpu.memory_space<vmem>>, vector<1x1x128xf32>
    %48 = vector.shape_cast %47 : vector<1x1x128xf32> to vector<1x128xf32>
    %49 = vector.broadcast %48 : vector<1x128xf32> to vector<8x128xf32>
    %50 = arith.addf %46, %49 : vector<8x128xf32>
    %cst_50 = arith.constant 0.000000e+00 : f32
    %51 = vector.broadcast %cst_50 : f32 to vector<8x128xf32>
    %52 = arith.maximumf %50, %51 : vector<8x128xf32>
    %c0_51 = arith.constant 0 : index
    %c0_52 = arith.constant 0 : index
    %53 = vector.load %arg5[%c0_51, %c0_52] : memref<8x128xf32, #tpu.memory_space<vmem>>, vector<8x128xf32>
    tpu.vector_store %arg5[%c0_51, %c0_52], %52 {strides = array<i32>} : memref<8x128xf32, #tpu.memory_space<vmem>>, vector<8x128xf32>,
    return
  }
  func.func @transform_0(%arg0: i32) -> (i32, i32) {
    %c0_i32 = arith.constant 0 : i32
    %c0_i32_0 = arith.constant 0 : i32
    return %arg0, %c0_i32 : i32, i32
  }
  func.func @transform_1(%arg0: i32) -> (i32, i32) {
    %c0_i32 = arith.constant 0 : i32
    %c0_i32_0 = arith.constant 0 : i32
    %c0_i32_1 = arith.constant 0 : i32
    return %c0_i32, %c0_i32_0 : i32, i32
  }
  func.func @transform_2(%arg0: i32) -> (i32, i32, i32) {
    %c0_i32 = arith.constant 0 : i32
    %c0_i32_0 = arith.constant 0 : i32
    %c0_i32_1 = arith.constant 0 : i32
    %c0_i32_2 = arith.constant 0 : i32
    return %c0_i32, %c0_i32_0, %c0_i32_1 : i32, i32, i32
  }
  func.func @transform_3(%arg0: i32) -> (i32, i32, i32) {
    %c0_i32 = arith.constant 0 : i32
    %c0_i32_0 = arith.constant 0 : i32
    %c0_i32_1 = arith.constant 0 : i32
    %c0_i32_2 = arith.constant 0 : i32
    return %c0_i32, %c0_i32_0, %c0_i32_1 : i32, i32, i32
  }
  func.func @transform_4(%arg0: i32) -> (i32, i32) {
    %c0_i32 = arith.constant 0 : i32
    %c0_i32_0 = arith.constant 0 : i32
    return %arg0, %c0_i32 : i32, i32
  }
}

</mosaic_0001>

<llo_original>
// kernel: custom_mlp_forward.1
$region0: #{custom_mlp_forward.1}
  #allocation0 [shape = 'u32[]', space=smem, size = 0x4, offset = 0x4, fixed_abs, tag = 'smem constant byte address 0x4 - core index']
  #allocation1 [shape = 'u32[72,128]{1,0:T(1,128)}', space=vmem, size = 0x9000, scoped, tag = 'internal scratch']
  #allocation2 [shape = 'f32[8,128]{1,0:T(8,128)}', space=vmem, size = 0x1000, scoped, tag = 'scratch operand']
  %s0 = inlined_call_operand.vmem [shape: f32[8,16], index: 0, kind: input, shape index: {}]
  %s1 = inlined_call_operand.vmem [shape: f32[16,128], index: 1, kind: input, shape index: {}]
  %s2 = inlined_call_operand.hbm [shape: f32[4,128,128], index: 2, kind: input, shape index: {}]
  %s3 = inlined_call_operand.hbm [shape: f32[5,1,128], index: 3, kind: input, shape index: {}]
  %s4 = inlined_call_operand.vmem [shape: f32[8,128], index: 4, kind: output, shape index: {}]
  %s5 = sld [smem:[#allocation0]]
  $region34: #{custom_mlp_forward.1} parent=0
    _
  %s7 = ssub.s32 1, %s5
  %s8 = scalar_select 0, %s7, %s5
  $region1: #{custom_mlp_forward.1} parent=0
    #allocation3 [shape = 'u8[262144]{0}', space=vmem, size = 0x40000, scoped, tag = 'input window, operand 2, single buffered']
    #allocation4 [shape = 's32[1]{0}', space=sflag, size = 0x4, scoped, tag = 'scoped memory for custom_mlp_forward.1']
    #allocation5 [shape = 'u8[2560]{0}', space=vmem, size = 0xc00, scoped, tag = 'input window, operand 3, single buffered']
    #allocation6 [shape = 's32[1]{0}', space=sflag, size = 0x4, scoped, tag = 'scoped memory for custom_mlp_forward.1']
    %9 = vsyncpa [#allocation4], 0
    %10 = vsyncpa [#allocation6], 0
    // Predicated region
    $region2: #{custom_mlp_forward.1} parent=1 // pred_check
      _
    $region3: #{custom_mlp_forward.1} parent=1 // pred_check_branch
      %12 = sbr.rel (0) target = $region5
    $region4: #{custom_mlp_forward.1} parent=1 // pred_region
      _
    $region5: #{custom_mlp_forward.1} parent=1 // pred_fallthru
      _
    // Predicated region
    $region6: #{custom_mlp_forward.1} parent=1 // pred_check
      _
    $region7: #{custom_mlp_forward.1} parent=1 // pred_check_branch
      %14 = sbr.rel (0) target = $region9
    $region8: #{custom_mlp_forward.1} parent=1 // pred_region
      _
    $region9: #{custom_mlp_forward.1} parent=1 // pred_fallthru
      _
    // Predicated region
    $region10: #{custom_mlp_forward.1} parent=1 // pred_check
      _
    $region11: #{custom_mlp_forward.1} parent=1 // pred_check_branch
      %16 = sbr.rel (0) target = $region13
    $region12: #{custom_mlp_forward.1} parent=1 // pred_region
      %18 = vsyncadd [#allocation4], 0
      %s19 = sshll.u32 %s2, 4
      %s20 = int_to_ptr.hbm [resolvable:$true] %s19
      %s21 = sshll.u32 [#allocation3], 4
      %s22 = int_to_ptr.vmem [resolvable:$true] %s21
      %27 = dma.hbm_to_vmem [thread:$0]  %s20, 8192, %s22, [#allocation4], 128, 128, 8
    $region13: #{custom_mlp_forward.1} parent=1 // pred_fallthru
      _
    // Predicated region
    $region14: #{custom_mlp_forward.1} parent=1 // pred_check
      _
    $region15: #{custom_mlp_forward.1} parent=1 // pred_check_branch
      %29 = sbr.rel (0) target = $region17
    $region16: #{custom_mlp_forward.1} parent=1 // pred_region
      %31 = vsyncadd [#allocation6], 0
      %s32 = sshll.u32 %s3, 4
      %s33 = int_to_ptr.hbm [resolvable:$true] %s32
      %s34 = sshll.u32 [#allocation5], 4
      %s35 = int_to_ptr.vmem [resolvable:$true] %s34
      %40 = dma.hbm_to_vmem [thread:$0]  %s33, 80, %s35, [#allocation6], 16, 16, 1
    $region17: #{custom_mlp_forward.1} parent=1 // pred_fallthru
      _
    // Predicated region
    $region18: #{custom_mlp_forward.1} parent=1 // pred_check
      _
    $region19: #{custom_mlp_forward.1} parent=1 // pred_check_branch
      %42 = sbr.rel (0) target = $region21
    $region20: #{custom_mlp_forward.1} parent=1 // pred_region
      %44 = dma.done [#allocation4], 8192
    $region21: #{custom_mlp_forward.1} parent=1 // pred_fallthru
      _
    // Predicated region
    $region22: #{custom_mlp_forward.1} parent=1 // pred_check
      _
    $region23: #{custom_mlp_forward.1} parent=1 // pred_check_branch
      %46 = sbr.rel (0) target = $region25
    $region24: #{custom_mlp_forward.1} parent=1 // pred_region
      %48 = dma.done [#allocation6], 80
    $region25: #{custom_mlp_forward.1} parent=1 // pred_fallthru
      _
    %v49 = vld [vmem:[%s0] sm:$0xff]
    %v50 = vld [vmem:[%s1] sm:$0xff]
    %v51 = vld [vmem:[%s1 + $0x8] sm:$0xff]
    %v52 = vld [vmem:[#allocation5] sm:$0x1]
    %v54 = vperm.slane %v52, 0
    %vm56 = vcmask 130048
    %v58 = vsel %vm56, %v49, 0
    %60 = vmatpush.msra.mxu0 0.0
    %61 = vmatpush.msra.mxu0 0.0
    %62 = vmatpush.msra.mxu0 0.0
    %63 = vmatpush.msra.mxu0 0.0
    %64 = vmatpush.msra.mxu0 0.0
    %65 = vmatpush.msra.mxu0 0.0
    %66 = vmatpush.msra.mxu0 0.0
    %67 = vmatpush.msra.mxu0 0.0
    %68 = vmatpush.msra.mxu0 0.0
    %69 = vmatpush.msra.mxu0 0.0
    %70 = vmatpush.msra.mxu0 0.0
    %71 = vmatpush.msra.mxu0 0.0
    %72 = vmatpush.msra.mxu0 0.0
    %73 = vmatpush.msra.mxu0 0.0
    %74 = vmatpush.msra.mxu0 %v51
    %75 = vmatpush.msra.mxu0 %v50
    %76 = vmatmul.f32.gmra.mxu0 %v58
    %v77 = vpop.f32.mrf.mxu0
    %v78 = vadd.f32 %v54, %v77
    %79 = vdwg.mxu0
    %v80 = vmax.f32 %v78, 0.0
    %81 = vst [vmem:[#allocation2] sm:$0xff] %v80
    %v82 = vld [vmem:[#allocation2] sm:$0xff]
    %v83 = vld [vmem:[#allocation3] sm:$0xff]
    %v84 = vld [vmem:[#allocation3 + $0x8] sm:$0xff]
    %v85 = vld [vmem:[#allocation3 + $0x10] sm:$0xff]
    %v86 = vld [vmem:[#allocation3 + $0x18] sm:$0xff]
    %v87 = vld [vmem:[#allocation3 + $0x20] sm:$0xff]
    %v88 = vld [vmem:[#allocation3 + $0x28] sm:$0xff]
    %v89 = vld [vmem:[#allocation3 + $0x30] sm:$0xff]
    %v90 = vld [vmem:[#allocation3 + $0x38] sm:$0xff]
    %v91 = vld [vmem:[#allocation3 + $0x40] sm:$0xff]
    %v92 = vld [vmem:[#allocation3 + $0x48] sm:$0xff]
    %v93 = vld [vmem:[#allocation3 + $0x50] sm:$0xff]
    %v94 = vld [vmem:[#allocation3 + $0x58] sm:$0xff]
    %v95 = vld [vmem:[#allocation3 + $0x60] sm:$0xff]
    %v96 = vld [vmem:[#allocation3 + $0x68] sm:$0xff]
    %v97 = vld [vmem:[#allocation3 + $0x70] sm:$0xff]
    %v98 = vld [vmem:[#allocation3 + $0x78] sm:$0xff]
    %s99 = scalar_lea.vmem [#allocation5], 1
    %v100 = vld [vmem:[%s99] sm:$0x1]
    %v102 = vperm.slane %v100, 0
    %104 = vmatpush.msra.mxu0 %v98
    %105 = vmatpush.msra.mxu0 %v97
    %106 = vmatpush.msra.mxu0 %v96
    %107 = vmatpush.msra.mxu0 %v95
    %108 = vmatpush.msra.mxu0 %v94
    %109 = vmatpush.msra.mxu0 %v93
    %110 = vmatpush.msra.mxu0 %v92
    %111 = vmatpush.msra.mxu0 %v91
    %112 = vmatpush.msra.mxu0 %v90
    %113 = vmatpush.msra.mxu0 %v89
    %114 = vmatpush.msra.mxu0 %v88
    %115 = vmatpush.msra.mxu0 %v87
    %116 = vmatpush.msra.mxu0 %v86
    %117 = vmatpush.msra.mxu0 %v85
    %118 = vmatpush.msra.mxu0 %v84
    %119 = vmatpush.msra.mxu0 %v83
    %120 = vmatmul.f32.gmra.mxu0 %v82
    %v121 = vpop.f32.mrf.mxu0
    %v122 = vadd.f32 %v102, %v121
    %123 = vdwg.mxu0
    %v124 = vmax.f32 %v122, 0.0
    %125 = vst [vmem:[#allocation2] sm:$0xff] %v124
    %v126 = vld [vmem:[#allocation2] sm:$0xff]
    %s127 = scalar_lea.vmem [#allocation3], 128
    %v128 = vld [vmem:[%s127] sm:$0xff]
    %v129 = vld [vmem:[%s127 + $0x8] sm:$0xff]
    %v130 = vld [vmem:[%s127 + $0x10] sm:$0xff]
    %v131 = vld [vmem:[%s127 + $0x18] sm:$0xff]
    %v132 = vld [vmem:[%s127 + $0x20] sm:$0xff]
    %v133 = vld [vmem:[%s127 + $0x28] sm:$0xff]
    %v134 = vld [vmem:[%s127 + $0x30] sm:$0xff]
    %v135 = vld [vmem:[%s127 + $0x38] sm:$0xff]
    %v136 = vld [vmem:[%s127 + $0x40] sm:$0xff]
    %v137 = vld [vmem:[%s127 + $0x48] sm:$0xff]
    %v138 = vld [vmem:[%s127 + $0x50] sm:$0xff]
    %v139 = vld [vmem:[%s127 + $0x58] sm:$0xff]
    %v140 = vld [vmem:[%s127 + $0x60] sm:$0xff]
    %v141 = vld [vmem:[%s127 + $0x68] sm:$0xff]
    %v142 = vld [vmem:[%s127 + $0x70] sm:$0xff]
    %v143 = vld [vmem:[%s127 + $0x78] sm:$0xff]
    %s144 = scalar_lea.vmem [#allocation5], 2
    %v145 = vld [vmem:[%s144] sm:$0x1]
    %v147 = vperm.slane %v145, 0
    %149 = vmatpush.msra.mxu0 %v143
    %150 = vmatpush.msra.mxu0 %v142
    %151 = vmatpush.msra.mxu0 %v141
    %152 = vmatpush.msra.mxu0 %v140
    %153 = vmatpush.msra.mxu0 %v139
    %154 = vmatpush.msra.mxu0 %v138
    %155 = vmatpush.msra.mxu0 %v137
    %156 = vmatpush.msra.mxu0 %v136
    %157 = vmatpush.msra.mxu0 %v135
    %158 = vmatpush.msra.mxu0 %v134
    %159 = vmatpush.msra.mxu0 %v133
    %160 = vmatpush.msra.mxu0 %v132
    %161 = vmatpush.msra.mxu0 %v131
    %162 = vmatpush.msra.mxu0 %v130
    %163 = vmatpush.msra.mxu0 %v129
    %164 = vmatpush.msra.mxu0 %v128
    %165 = vmatmul.f32.gmra.mxu0 %v126
    %v166 = vpop.f32.mrf.mxu0
    %v167 = vadd.f32 %v147, %v166
    %168 = vdwg.mxu0
    %v169 = vmax.f32 %v167, 0.0
    %170 = vst [vmem:[#allocation2] sm:$0xff] %v169
    %v171 = vld [vmem:[#allocation2] sm:$0xff]
    %s172 = scalar_lea.vmem [#allocation3], 256
    %v173 = vld [vmem:[%s172] sm:$0xff]
    %v174 = vld [vmem:[%s172 + $0x8] sm:$0xff]
    %v175 = vld [vmem:[%s172 + $0x10] sm:$0xff]
    %v176 = vld [vmem:[%s172 + $0x18] sm:$0xff]
    %v177 = vld [vmem:[%s172 + $0x20] sm:$0xff]
    %v178 = vld [vmem:[%s172 + $0x28] sm:$0xff]
    %v179 = vld [vmem:[%s172 + $0x30] sm:$0xff]
    %v180 = vld [vmem:[%s172 + $0x38] sm:$0xff]
    %v181 = vld [vmem:[%s172 + $0x40] sm:$0xff]
    %v182 = vld [vmem:[%s172 + $0x48] sm:$0xff]
    %v183 = vld [vmem:[%s172 + $0x50] sm:$0xff]
    %v184 = vld [vmem:[%s172 + $0x58] sm:$0xff]
    %v185 = vld [vmem:[%s172 + $0x60] sm:$0xff]
    %v186 = vld [vmem:[%s172 + $0x68] sm:$0xff]
    %v187 = vld [vmem:[%s172 + $0x70] sm:$0xff]
    %v188 = vld [vmem:[%s172 + $0x78] sm:$0xff]
    %s189 = scalar_lea.vmem [#allocation5], 3
    %v190 = vld [vmem:[%s189] sm:$0x1]
    %v192 = vperm.slane %v190, 0
    %194 = vmatpush.msra.mxu0 %v188
    %195 = vmatpush.msra.mxu0 %v187
    %196 = vmatpush.msra.mxu0 %v186
    %197 = vmatpush.msra.mxu0 %v185
    %198 = vmatpush.msra.mxu0 %v184
    %199 = vmatpush.msra.mxu0 %v183
    %200 = vmatpush.msra.mxu0 %v182
    %201 = vmatpush.msra.mxu0 %v181
    %202 = vmatpush.msra.mxu0 %v180
    %203 = vmatpush.msra.mxu0 %v179
    %204 = vmatpush.msra.mxu0 %v178
    %205 = vmatpush.msra.mxu0 %v177
    %206 = vmatpush.msra.mxu0 %v176
    %207 = vmatpush.msra.mxu0 %v175
    %208 = vmatpush.msra.mxu0 %v174
    %209 = vmatpush.msra.mxu0 %v173
    %210 = vmatmul.f32.gmra.mxu0 %v171
    %v211 = vpop.f32.mrf.mxu0
    %v212 = vadd.f32 %v192, %v211
    %213 = vdwg.mxu0
    %v214 = vmax.f32 %v212, 0.0
    %215 = vst [vmem:[#allocation2] sm:$0xff] %v214
    %v216 = vld [vmem:[#allocation2] sm:$0xff]
    %s217 = scalar_lea.vmem [#allocation3], 384
    %v218 = vld [vmem:[%s217] sm:$0xff]
    %v219 = vld [vmem:[%s217 + $0x8] sm:$0xff]
    %v220 = vld [vmem:[%s217 + $0x10] sm:$0xff]
    %v221 = vld [vmem:[%s217 + $0x18] sm:$0xff]
    %v222 = vld [vmem:[%s217 + $0x20] sm:$0xff]
    %v223 = vld [vmem:[%s217 + $0x28] sm:$0xff]
    %v224 = vld [vmem:[%s217 + $0x30] sm:$0xff]
    %v225 = vld [vmem:[%s217 + $0x38] sm:$0xff]
    %v226 = vld [vmem:[%s217 + $0x40] sm:$0xff]
    %v227 = vld [vmem:[%s217 + $0x48] sm:$0xff]
    %v228 = vld [vmem:[%s217 + $0x50] sm:$0xff]
    %v229 = vld [vmem:[%s217 + $0x58] sm:$0xff]
    %v230 = vld [vmem:[%s217 + $0x60] sm:$0xff]
    %v231 = vld [vmem:[%s217 + $0x68] sm:$0xff]
    %v232 = vld [vmem:[%s217 + $0x70] sm:$0xff]
    %v233 = vld [vmem:[%s217 + $0x78] sm:$0xff]
    %s234 = scalar_lea.vmem [#allocation5], 4
    %v235 = vld [vmem:[%s234] sm:$0x1]
    %v237 = vperm.slane %v235, 0
    %239 = vmatpush.msra.mxu0 %v233
    %240 = vmatpush.msra.mxu0 %v232
    %241 = vmatpush.msra.mxu0 %v231
    %242 = vmatpush.msra.mxu0 %v230
    %243 = vmatpush.msra.mxu0 %v229
    %244 = vmatpush.msra.mxu0 %v228
    %245 = vmatpush.msra.mxu0 %v227
    %246 = vmatpush.msra.mxu0 %v226
    %247 = vmatpush.msra.mxu0 %v225
    %248 = vmatpush.msra.mxu0 %v224
    %249 = vmatpush.msra.mxu0 %v223
    %250 = vmatpush.msra.mxu0 %v222
    %251 = vmatpush.msra.mxu0 %v221
    %252 = vmatpush.msra.mxu0 %v220
    %253 = vmatpush.msra.mxu0 %v219
    %254 = vmatpush.msra.mxu0 %v218
    %255 = vmatmul.f32.gmra.mxu0 %v216
    %v256 = vpop.f32.mrf.mxu0
    %v257 = vadd.f32 %v237, %v256
    %258 = vdwg.mxu0
    %v259 = vmax.f32 %v257, 0.0
    %260 = vst [vmem:[%s4] sm:$0xff] %v259
    // Predicated region
    $region26: #{custom_mlp_forward.1} parent=1 // pred_check
      _
    $region27: #{custom_mlp_forward.1} parent=1 // pred_check_branch
      %262 = sbr.rel (0) target = $region29
    $region28: #{custom_mlp_forward.1} parent=1 // pred_region
      _
    $region29: #{custom_mlp_forward.1} parent=1 // pred_fallthru
      _
    // Predicated region
    $region30: #{custom_mlp_forward.1} parent=1 // pred_check
      _
    $region31: #{custom_mlp_forward.1} parent=1 // pred_check_branch
      %264 = sbr.rel (0) target = $region33
    $region32: #{custom_mlp_forward.1} parent=1 // pred_region
      _
    $region33: #{custom_mlp_forward.1} parent=1 // pred_fallthru
      _
    %265 = vsyncpa [#allocation4], 1
    %266 = vsyncpa [#allocation6], 1

</llo_original>
